<compile_context>
chip_gen: v7x
topology: tpu7x:2x2x1
jax: 0.10.0
libtpu: 0.0.40
codegen_flags: <defaults>
</compile_context>

<pallas_src>
import math

import jax
import jax.numpy as jnp
from jax.experimental import pallas as pl
from jax.experimental.pallas import tpu as pltpu


def _drop_path_kernel(m_ref, x_ref, o_ref):
    # m_ref: (TR, 1) per-row keep*scale factor (already includes 1/keep_prob);
    #        broadcasts along the lane (feature) axis.
    # x_ref / o_ref: (TR, TC) tiles of the row-folded (rows, C) input/output.
    o_ref[...] = x_ref[...] * m_ref[...]


def drop_path_pallas(x, key, drop_prob: float = 0.0, training: bool = False,
                     scale_by_keep: bool = True):
    """JAX/Pallas equivalent of drop_path(x, drop_prob, training, scale_by_keep)."""
    if drop_prob == 0.0 or not training:
        return x

    keep_prob = 1.0 - drop_prob
    orig_shape = x.shape
    B = x.shape[0]
    F = int(math.prod(x.shape[1:]))

    # Per-sample keep decision, computed once outside the grid, pre-scaled and
    # cast to the input dtype so the kernel multiplies in the native dtype.
    keep = jax.random.bernoulli(key, p=keep_prob, shape=(B, 1))
    scale = (1.0 / keep_prob) if (scale_by_keep and keep_prob > 0.0) else 1.0
    mask = keep.astype(x.dtype) * jnp.asarray(scale, dtype=x.dtype)

    # --- Layout: fold features into rows for sublane/lane-dense tiles --------
    itemsize = jnp.dtype(x.dtype).itemsize
    if F % 128 == 0:
        C = 128
        while C * 2 <= 2048 and F % (C * 2) == 0:   # lane-dense width, <= 2048
            C *= 2
        R = F // C
    else:
        C, R = F, 1                                  # fallback: keep (B, F) view
    rows = B * R

    xf = x.reshape(rows, C)
    mask_rows = jnp.repeat(mask, R, axis=0) if R > 1 else mask   # (rows, 1)

    # --- Tiling ---------------------------------------------------------------
    sub = max(8, 32 // itemsize)                 # sublane packing: 8 f32 / 16 bf16 / 32 i8
    TC = C if C <= 8192 else 8192                # 8192 % 128 == 0 (fallback path only)
    bytes_per_row = TC * itemsize
    max_rows = max(sub, (2 * 1024 * 1024) // max(bytes_per_row, 1))  # ~2 MiB tiles
    if rows <= max_rows:
        TR = rows                                # block dim == full dim is always legal
    else:
        TR = max(sub, (max_rows // sub) * sub)   # multiple of the sublane packing

    grid = (pl.cdiv(rows, TR), pl.cdiv(C, TC))

    out = pl.pallas_call(
        _drop_path_kernel,
        out_shape=jax.ShapeDtypeStruct((rows, C), x.dtype),
        grid=grid,
        in_specs=[
            pl.BlockSpec((TR, 1), lambda i, j: (i, 0)),    # per-row mask column
            pl.BlockSpec((TR, TC), lambda i, j: (i, j)),   # data tile
        ],
        out_specs=pl.BlockSpec((TR, TC), lambda i, j: (i, j)),
        compiler_params=pltpu.CompilerParams(
            dimension_semantics=("parallel", "parallel"),  # megacore-friendly on v7x
        ),
        cost_estimate=pl.CostEstimate(
            flops=B * F,
            transcendentals=0,
            bytes_accessed=2 * B * F * itemsize + rows * itemsize,
        ),
    )(mask_rows, xf)

    return out.reshape(orig_shape)


class DropPath:
    """Drop paths (Stochastic Depth) per sample, Pallas-backed."""

    def __init__(self, drop_prob: float = 0.0, scale_by_keep: bool = True):
        self.drop_prob = drop_prob
        self.scale_by_keep = scale_by_keep
        self.training = True

    def __call__(self, x, seed: int = 0):
        # NOTE: derive a fresh seed/key per training step in real use so drop
        # patterns do not repeat across calls.
        key = jax.random.PRNGKey(seed)
        return drop_path_pallas(
            x,
            key,
            drop_prob=self.drop_prob,
            training=self.training,
            scale_by_keep=self.scale_by_keep,
        )


if __name__ == "__main__":
    key = jax.random.PRNGKey(0)
    # Small NCHW input consistent with a vision-RWKV block residual path.
    x = jax.random.normal(key, (2, 4, 16, 16), dtype=jnp.float32)

    module = DropPath(drop_prob=0.25, scale_by_keep=True)
    module.training = True

    out = jax.block_until_ready(module(x, seed=0))
    assert out.shape == x.shape and out.dtype == x.dtype

    # Each sample must be either fully zeroed or scaled by exactly 1/keep_prob.
    keep_prob = 1.0 - module.drop_prob
    for b in range(x.shape[0]):
        dropped = bool(jnp.allclose(out[b], 0.0))
        kept = bool(jnp.allclose(out[b], x[b] * (1.0 / keep_prob), rtol=1e-5, atol=1e-5))
        assert dropped or kept

    # Eval / drop_prob==0 path is an identity passthrough (matches PyTorch).
    module.training = False
    out_eval = jax.block_until_ready(module(x, seed=0))
    assert bool(jnp.allclose(out_eval, x))

    print("KERNEL_OK")
</pallas_src>

<mosaic_0001>
module attributes {stable_mosaic.version = 11 : i64} {
  func.func @_drop_path_kernel(%arg0: i32, %arg1: i32, %arg2: memref<2x1xf32, #tpu.memory_space<vmem>>, %arg3: memref<2x1024xf32, #tpu.memory_space<vmem>>, %arg4: memref<2x1024xf32, #tpu.memory_space<vmem>>) attributes {dimension_semantics = [#tpu.dimension_semantics<parallel>, #tpu.dimension_semantics<parallel>], iteration_bounds = array<i64: 1, 1>, scalar_prefetch = 0 : i64, scratch_operands = 0 : i64, tpu.core_type = #tpu.core_type<tc>, window_params = [{transform_indices = @transform_0, window_bounds = array<i64: 2, 1>}, {transform_indices = @transform_1, window_bounds = array<i64: 2, 1024>}, {transform_indices = @transform_2, window_bounds = array<i64: 2, 1024>}]} {
    %c0 = arith.constant 0 : index
    %c0_0 = arith.constant 0 : index
    %0 = vector.load %arg3[%c0, %c0_0] : memref<2x1024xf32, #tpu.memory_space<vmem>>, vector<2x1024xf32>
    %c0_1 = arith.constant 0 : index
    %c0_2 = arith.constant 0 : index
    %1 = vector.load %arg2[%c0_1, %c0_2] : memref<2x1xf32, #tpu.memory_space<vmem>>, vector<2x1xf32>
    %2 = vector.broadcast %1 : vector<2x1xf32> to vector<2x1024xf32>
    %3 = arith.mulf %0, %2 : vector<2x1024xf32>
    %c0_3 = arith.constant 0 : index
    %c0_4 = arith.constant 0 : index
    %4 = vector.load %arg4[%c0_3, %c0_4] : memref<2x1024xf32, #tpu.memory_space<vmem>>, vector<2x1024xf32>
    tpu.vector_store %arg4[%c0_3, %c0_4], %3 {strides = array<i32>} : memref<2x1024xf32, #tpu.memory_space<vmem>>, vector<2x1024xf32>,
    return
  }
  func.func @transform_0(%arg0: i32, %arg1: i32) -> (i32, i32) {
    %c0_i32 = arith.constant 0 : i32
    %c0_i32_0 = arith.constant 0 : i32
    return %arg0, %c0_i32 : i32, i32
  }
  func.func @transform_1(%arg0: i32, %arg1: i32) -> (i32, i32) {
    %c0_i32 = arith.constant 0 : i32
    return %arg0, %arg1 : i32, i32
  }
  func.func @transform_2(%arg0: i32, %arg1: i32) -> (i32, i32) {
    %c0_i32 = arith.constant 0 : i32
    return %arg0, %arg1 : i32, i32
  }
}

</mosaic_0001>

<llo_original>
// kernel: tpu_custom_call.1
$region0: #{tpu_custom_call.1}
  #allocation0 [shape = 'u32[]', space=smem, size = 0x4, offset = 0x4, fixed_abs, tag = 'smem constant byte address 0x4 - core index']
  #allocation1 [shape = 'u32[144,128]{1,0:T(1,128)}', space=vmem, size = 0x12000, scoped, tag = 'internal scratch']
  %s0 = inlined_call_operand.vmem [shape: f32[2,1], index: 0, kind: input, shape index: {}]
  %s1 = inlined_call_operand.hbm [shape: f32[2,1024], index: 1, kind: input, shape index: {}]
  %s2 = inlined_call_operand.hbm [shape: f32[2,1024], index: 2, kind: output, shape index: {}]
  %s3 = sld [smem:[#allocation0]]
  $region22: #{tpu_custom_call.1} parent=0
    _
  %s5 = ssub.s32 1, %s3
  %s6 = scalar_select 0, %s5, %s3
  $region1: #{tpu_custom_call.1} parent=0
    #allocation2 [shape = 'u8[8192]{0}', space=vmem, size = 0x2000, scoped, tag = 'input window, operand 1, single buffered']
    #allocation3 [shape = 's32[1]{0}', space=sflag, size = 0x4, scoped, tag = 'scoped memory for tpu_custom_call.1']
    #allocation4 [shape = 's32[1]{0}', space=sflag, size = 0x4, scoped, tag = 'scoped memory for tpu_custom_call.1']
    #allocation5 [shape = 'u8[8192]{0}', space=vmem, size = 0x2000, scoped, tag = 'output window, operand 0, single buffered']
    %7 = vsyncpa [#allocation3], 0
    %8 = vsyncpa [#allocation4], 0
    // Predicated region
    $region2: #{tpu_custom_call.1} parent=1 // pred_check
      _
    $region3: #{tpu_custom_call.1} parent=1 // pred_check_branch
      %10 = sbr.rel (0) target = $region5
    $region4: #{tpu_custom_call.1} parent=1 // pred_region
      _
    $region5: #{tpu_custom_call.1} parent=1 // pred_fallthru
      _
    // Predicated region
    $region6: #{tpu_custom_call.1} parent=1 // pred_check
      _
    $region7: #{tpu_custom_call.1} parent=1 // pred_check_branch
      %12 = sbr.rel (0) target = $region9
    $region8: #{tpu_custom_call.1} parent=1 // pred_region
      %s14 = ssub.s32 256, 256
      %15 = vsyncadd [#allocation3], %s14
      %s17 = sshll.u32 [#allocation2], 4
      %s18 = int_to_ptr.vmem [resolvable:$true] %s17
      %20 = dma.hbm_to_vmem [thread:$0]  %s1, 256, %s18, [#allocation3]
    $region9: #{tpu_custom_call.1} parent=1 // pred_fallthru
      _
    // Predicated region
    $region10: #{tpu_custom_call.1} parent=1 // pred_check
      _
    $region11: #{tpu_custom_call.1} parent=1 // pred_check_branch
      %22 = sbr.rel (0) target = $region13
    $region12: #{tpu_custom_call.1} parent=1 // pred_region
      %23 = dma.done [#allocation3], 256
    $region13: #{tpu_custom_call.1} parent=1 // pred_fallthru
      _
    %v24 = vld [vmem:[#allocation2] sm:$0xff]
    %v25 = vld [vmem:[#allocation2 + $0x8] sm:$0xff]
    %v26 = vld [vmem:[%s0] sm:$0x3]
    %28 = vset.pattern.permute.xlu0 0
    %29 = vperm.xlu0 %28, %v26
    %v30 = vpop.permute.xlu0 %29
    %v32 = vunpack.c.l.s4 269488144
    %v33 = vunpack.c.0.s8 %v32
    %v34 = vlaneseq
    %v35 = vshrl.u32 %v34, 7
    %v36 = vsub.s32 %v33, %v35
    %v37 = vrot.slane %v30, %v36
    %v39 = vmul.f32 %v24, %v37
    %v40 = vmul.f32 %v25, %v37
    %41 = vst [vmem:[#allocation5] sm:$0xff] %v39
    %42 = vst [vmem:[#allocation5 + $0x8] sm:$0xff] %v40
    // Predicated region
    $region14: #{tpu_custom_call.1} parent=1 // pred_check
      _
    $region15: #{tpu_custom_call.1} parent=1 // pred_check_branch
      %44 = sbr.rel (0) target = $region17
    $region16: #{tpu_custom_call.1} parent=1 // pred_region
      %s46 = ssub.s32 256, 256
      %47 = vsyncadd [#allocation4], %s46
      %s49 = sshll.u32 [#allocation5], 4
      %s50 = int_to_ptr.vmem [resolvable:$true] %s49
      %52 = dma.vmem_to_hbm [thread:$0]  %s50, 256, %s2, [#allocation4]
    $region17: #{tpu_custom_call.1} parent=1 // pred_fallthru
      _
    // Predicated region
    $region18: #{tpu_custom_call.1} parent=1 // pred_check
      _
    $region19: #{tpu_custom_call.1} parent=1 // pred_check_branch
      %54 = sbr.rel (0) target = $region21
    $region20: #{tpu_custom_call.1} parent=1 // pred_region
      %55 = dma.done [#allocation4], 256
    $region21: #{tpu_custom_call.1} parent=1 // pred_fallthru
      _
    %56 = vsyncpa [#allocation3], 1
    %57 = vsyncpa [#allocation4], 1

</llo_original>
